<compile_context>
chip_gen: v7x
topology: tpu7x:2x2x1
jax: 0.10.0
libtpu: 0.0.40
codegen_flags: <defaults>
</compile_context>

<pallas_src>
import functools

import jax
import jax.numpy as jnp
from jax.experimental import pallas as pl
from jax.experimental.pallas import tpu as pltpu


# ----------------------------- parameter glue -----------------------------

def ortho2rotation(poses):
    """poses: [B, 6] -> [B, 3, 3] rotation matrices (columns x, y, z)."""
    x_raw = poses[:, 0:3]
    y_raw = poses[:, 3:6]

    def normalize_vector(v):
        mag = jnp.sqrt(jnp.sum(v ** 2, axis=1, keepdims=True))
        mag = jnp.maximum(mag, 1e-8)
        return v / mag

    def proj_u2a(u, a):
        inner = jnp.sum(u * a, axis=1, keepdims=True)
        norm2 = jnp.maximum(jnp.sum(u ** 2, axis=1, keepdims=True), 1e-8)
        return (inner / norm2) * u

    x = normalize_vector(x_raw)
    y = normalize_vector(y_raw - proj_u2a(x, y_raw))
    z = jnp.cross(x, y)
    # torch.cat((x[:,:,None], y[:,:,None], z[:,:,None]), 2) -> columns x, y, z
    return jnp.stack([x, y, z], axis=2)


# ------------------------------ Pallas kernel ------------------------------

def _transform_kernel(params_ref, pts_ref, out_ref):
    # params_ref: SMEM f32[12] = [R00,R01,R02, R10,R11,R12, R20,R21,R22, tx,ty,tz]
    # pts_ref:    VMEM (3, TN) lane-dense tile of points (row j = component j)
    # out_ref:    VMEM (3, TN)
    #
    # out[i, n] = sum_j R[i, j] * p[j, n] + t[i]      (9 VPU FMAs, no MXU)
    r00 = params_ref[0]
    r01 = params_ref[1]
    r02 = params_ref[2]
    r10 = params_ref[3]
    r11 = params_ref[4]
    r12 = params_ref[5]
    r20 = params_ref[6]
    r21 = params_ref[7]
    r22 = params_ref[8]
    tx = params_ref[9]
    ty = params_ref[10]
    tz = params_ref[11]

    x = pts_ref[0:1, :]
    y = pts_ref[1:2, :]
    z = pts_ref[2:3, :]

    out_ref[0:1, :] = r00 * x + r01 * y + r02 * z + tx
    out_ref[1:2, :] = r10 * x + r11 * y + r12 * z + ty
    out_ref[2:3, :] = r20 * x + r21 * y + r22 * z + tz


def _round_up(a, b):
    return ((a + b - 1) // b) * b


@functools.partial(jax.jit, static_argnames=("tile_n",))
def transform_points(points, rot6d, trans, *, tile_n=32768):
    """points: [1, N, 3]; rot6d: [1, 6]; trans: [1, 3] -> [1, N, 3]."""
    pts = points[0]                       # [N, 3]
    n = pts.shape[0]

    rot_mat = ortho2rotation(rot6d)[0]    # [3, 3]
    # Flattened params for SMEM scalar prefetch: R (row-major) then t.
    params = jnp.concatenate(
        [rot_mat.reshape(-1), trans[0].reshape(-1)]
    ).astype(jnp.float32)                 # [12]

    # Lane-aligned tile; for small N collapse to a single grid step.
    tile = max(128, min(_round_up(tile_n, 128), _round_up(n, 128)))
    n_pad = _round_up(n, tile)

    # Lane-dense relayout [N,3] -> [3, n_pad]; transpose + zero-pad fuse into
    # a single XLA copy in the wrapper.
    pts_t = jnp.transpose(pts)            # [3, N]
    if n_pad != n:
        pts_t = jnp.pad(pts_t, ((0, 0), (0, n_pad - n)))

    grid = (n_pad // tile,)

    out_t = pl.pallas_call(
        _transform_kernel,
        out_shape=jax.ShapeDtypeStruct((3, n_pad), points.dtype),
        grid_spec=pltpu.PrefetchScalarGridSpec(
            num_scalar_prefetch=1,        # params -> SMEM, passed to index_maps
            grid=grid,
            in_specs=[
                pl.BlockSpec((3, tile), lambda i, params: (0, i)),   # points
            ],
            out_specs=pl.BlockSpec((3, tile), lambda i, params: (0, i)),
        ),
        compiler_params=pltpu.CompilerParams(
            dimension_semantics=("parallel",),   # shards tiles across TCs (v7x)
        ),
    )(params, pts_t)

    # Back to the module's [1, N, 3] layout (padded lanes sliced away).
    return jnp.transpose(out_t[:, :n])[None, :, :]


# ----------------------------------- main -----------------------------------

if __name__ == "__main__":
    key = jax.random.PRNGKey(0)
    k_rot, k_pts = jax.random.split(key)

    # Deterministic parameter init (shapes as in Transformation.__init__):
    #   rot6d ~ U[0,1) of shape (1, 6), trans = zeros (1, 3)
    rot6d = jax.random.uniform(k_rot, (1, 6), dtype=jnp.float32)
    trans = jnp.zeros((1, 3), dtype=jnp.float32)

    # points: [1, N, 3]  (N deliberately not a multiple of 128 so the padded
    # tail of the single block is exercised)
    N = 300
    points = jax.random.normal(k_pts, (1, N, 3), dtype=jnp.float32)

    out = transform_points(points, rot6d, trans)
    out = jax.block_until_ready(out)

    # pure-JAX reference check
    rot_mat = ortho2rotation(rot6d)[0]
    ref = (points[0] @ rot_mat.T + trans[0])[None]
    assert out.shape == (1, N, 3)
    assert jnp.allclose(out, ref, atol=1e-5, rtol=1e-5)

    print("KERNEL_OK")
</pallas_src>

<mosaic_0001>
module attributes {stable_mosaic.version = 11 : i64} {
  func.func @_transform_kernel(%arg0: i32, %arg1: memref<12xf32, #tpu.memory_space<smem>>, %arg2: memref<3x384xf32, #tpu.memory_space<vmem>>, %arg3: memref<3x384xf32, #tpu.memory_space<vmem>>) attributes {dimension_semantics = [#tpu.dimension_semantics<parallel>], iteration_bounds = array<i64: 1>, scalar_prefetch = 1 : i64, scratch_operands = 0 : i64, tpu.core_type = #tpu.core_type<tc>, window_params = [{transform_indices = @transform_0, window_bounds = array<i64: 3, 384>}, {transform_indices = @transform_1, window_bounds = array<i64: 3, 384>}]} {
    %c0 = arith.constant 0 : index
    %0 = memref.load %arg1[%c0] : memref<12xf32, #tpu.memory_space<smem>>
    %c1 = arith.constant 1 : index
    %1 = memref.load %arg1[%c1] : memref<12xf32, #tpu.memory_space<smem>>
    %c2 = arith.constant 2 : index
    %2 = memref.load %arg1[%c2] : memref<12xf32, #tpu.memory_space<smem>>
    %c3 = arith.constant 3 : index
    %3 = memref.load %arg1[%c3] : memref<12xf32, #tpu.memory_space<smem>>
    %c4 = arith.constant 4 : index
    %4 = memref.load %arg1[%c4] : memref<12xf32, #tpu.memory_space<smem>>
    %c5 = arith.constant 5 : index
    %5 = memref.load %arg1[%c5] : memref<12xf32, #tpu.memory_space<smem>>
    %c6 = arith.constant 6 : index
    %6 = memref.load %arg1[%c6] : memref<12xf32, #tpu.memory_space<smem>>
    %c7 = arith.constant 7 : index
    %7 = memref.load %arg1[%c7] : memref<12xf32, #tpu.memory_space<smem>>
    %c8 = arith.constant 8 : index
    %8 = memref.load %arg1[%c8] : memref<12xf32, #tpu.memory_space<smem>>
    %c9 = arith.constant 9 : index
    %9 = memref.load %arg1[%c9] : memref<12xf32, #tpu.memory_space<smem>>
    %c10 = arith.constant 10 : index
    %10 = memref.load %arg1[%c10] : memref<12xf32, #tpu.memory_space<smem>>
    %c11 = arith.constant 11 : index
    %11 = memref.load %arg1[%c11] : memref<12xf32, #tpu.memory_space<smem>>
    %c0_0 = arith.constant 0 : index
    %c0_1 = arith.constant 0 : index
    %12 = vector.load %arg2[%c0_0, %c0_1] : memref<3x384xf32, #tpu.memory_space<vmem>>, vector<1x384xf32>
    %c1_2 = arith.constant 1 : index
    %c0_3 = arith.constant 0 : index
    %13 = vector.load %arg2[%c1_2, %c0_3] : memref<3x384xf32, #tpu.memory_space<vmem>>, vector<1x384xf32>
    %c2_4 = arith.constant 2 : index
    %c0_5 = arith.constant 0 : index
    %14 = vector.load %arg2[%c2_4, %c0_5] : memref<3x384xf32, #tpu.memory_space<vmem>>, vector<1x384xf32>
    %15 = vector.broadcast %0 : f32 to vector<1x384xf32>
    %16 = arith.mulf %15, %12 : vector<1x384xf32>
    %17 = vector.broadcast %1 : f32 to vector<1x384xf32>
    %18 = arith.mulf %17, %13 : vector<1x384xf32>
    %19 = arith.addf %16, %18 : vector<1x384xf32>
    %20 = vector.broadcast %2 : f32 to vector<1x384xf32>
    %21 = arith.mulf %20, %14 : vector<1x384xf32>
    %22 = arith.addf %19, %21 : vector<1x384xf32>
    %23 = vector.broadcast %9 : f32 to vector<1x384xf32>
    %24 = arith.addf %22, %23 : vector<1x384xf32>
    %c0_6 = arith.constant 0 : index
    %c0_7 = arith.constant 0 : index
    %25 = vector.load %arg3[%c0_6, %c0_7] : memref<3x384xf32, #tpu.memory_space<vmem>>, vector<1x384xf32>
    tpu.vector_store %arg3[%c0_6, %c0_7], %24 {strides = array<i32>} : memref<3x384xf32, #tpu.memory_space<vmem>>, vector<1x384xf32>,
    %26 = vector.broadcast %3 : f32 to vector<1x384xf32>
    %27 = arith.mulf %26, %12 : vector<1x384xf32>
    %28 = vector.broadcast %4 : f32 to vector<1x384xf32>
    %29 = arith.mulf %28, %13 : vector<1x384xf32>
    %30 = arith.addf %27, %29 : vector<1x384xf32>
    %31 = vector.broadcast %5 : f32 to vector<1x384xf32>
    %32 = arith.mulf %31, %14 : vector<1x384xf32>
    %33 = arith.addf %30, %32 : vector<1x384xf32>
    %34 = vector.broadcast %10 : f32 to vector<1x384xf32>
    %35 = arith.addf %33, %34 : vector<1x384xf32>
    %c1_8 = arith.constant 1 : index
    %c0_9 = arith.constant 0 : index
    %36 = vector.load %arg3[%c1_8, %c0_9] : memref<3x384xf32, #tpu.memory_space<vmem>>, vector<1x384xf32>
    tpu.vector_store %arg3[%c1_8, %c0_9], %35 {strides = array<i32>} : memref<3x384xf32, #tpu.memory_space<vmem>>, vector<1x384xf32>,
    %37 = vector.broadcast %6 : f32 to vector<1x384xf32>
    %38 = arith.mulf %37, %12 : vector<1x384xf32>
    %39 = vector.broadcast %7 : f32 to vector<1x384xf32>
    %40 = arith.mulf %39, %13 : vector<1x384xf32>
    %41 = arith.addf %38, %40 : vector<1x384xf32>
    %42 = vector.broadcast %8 : f32 to vector<1x384xf32>
    %43 = arith.mulf %42, %14 : vector<1x384xf32>
    %44 = arith.addf %41, %43 : vector<1x384xf32>
    %45 = vector.broadcast %11 : f32 to vector<1x384xf32>
    %46 = arith.addf %44, %45 : vector<1x384xf32>
    %c2_10 = arith.constant 2 : index
    %c0_11 = arith.constant 0 : index
    %47 = vector.load %arg3[%c2_10, %c0_11] : memref<3x384xf32, #tpu.memory_space<vmem>>, vector<1x384xf32>
    tpu.vector_store %arg3[%c2_10, %c0_11], %46 {strides = array<i32>} : memref<3x384xf32, #tpu.memory_space<vmem>>, vector<1x384xf32>,
    return
  }
  func.func @transform_0(%arg0: i32, %arg1: memref<12xf32, #tpu.memory_space<smem>>) -> (i32, i32) {
    %c0_i32 = arith.constant 0 : i32
    %c0_i32_0 = arith.constant 0 : i32
    return %c0_i32, %arg0 : i32, i32
  }
  func.func @transform_1(%arg0: i32, %arg1: memref<12xf32, #tpu.memory_space<smem>>) -> (i32, i32) {
    %c0_i32 = arith.constant 0 : i32
    %c0_i32_0 = arith.constant 0 : i32
    return %c0_i32, %arg0 : i32, i32
  }
}

</mosaic_0001>

<llo_original>
// kernel: squeeze.16
$region0: #{squeeze.16}
  %s0 = inlined_call_operand.vmem [shape: f32[1,3,3], index: 0, kind: input, shape index: {}]
  %s1 = inlined_call_operand.vmem [shape: f32[9], index: 1, kind: output, shape index: {}]
  $region1: #{squeeze.16} parent=0
    #allocation0 [shape = 'u8[4096]{0}', space=vmem, size = 0x1000, scoped, tag = 'scoped mem for output reshape']
    #allocation1 [shape = 'u8[4096]{0}', space=vmem, size = 0x1000, scoped, tag = 'scoped mem for input reshape']
    %s3 = sshllo.u32 0, 4
    %v4 = vld [vmem:[%s0] sm:%s3]
    %5 = vst [vmem:[#allocation1] sm:%s3] %v4
    %v6 = vld [vmem:[#allocation1] sm:$0x1]
    %vm7 = vcmask 23552
    %8 = vst.msk [vmem:[#allocation0] sm:$0x1] %vm7, %v6
    %s9 = scalar_lea.vmem [#allocation1], 2
    %v10 = vld [vmem:[%s9] sm:$0x1]
    %11 = vrot.lane.b32.xlu0 %v10, 6
    %v12 = vpop.permute.xlu0 %11
    %vm13 = vcmask 72752
    %14 = vst.msk [vmem:[#allocation0] sm:$0x1] %vm13, %v12
    %s15 = scalar_lea.vmem [#allocation1], 1
    %v16 = vld [vmem:[%s15] sm:$0x1]
    %17 = vrot.lane.b32.xlu0 %v16, 3
    %v18 = vpop.permute.xlu0 %17
    %vm19 = vcmask 48152
    %20 = vst.msk [vmem:[#allocation0] sm:$0x1] %vm19, %v18
    %s22 = sshllo.u32 0, 1
    %v24 = vld [vmem:[#allocation0] sm:%s22]
    %s25 = sshllo.u32 0, 1
    %26 = vst [vmem:[%s1] sm:%s25] %v24

// kernel: transform_points.1
$region0: #{transform_points.1}
  #allocation0 [shape = 'u32[]', space=smem, size = 0x4, offset = 0x4, fixed_abs, tag = 'smem constant byte address 0x4 - core index']
  #allocation1 [shape = 'u32[144,128]{1,0:T(1,128)}', space=vmem, size = 0x12000, scoped, tag = 'internal scratch']
  #allocation2 [shape = 's32[1]{0}', space=sflag, size = 0x4, scoped, tag = 'scoped memory for transform_points.1']
  #allocation3 [shape = 'u8[512]{0}', space=smem, size = 0x200, scoped, tag = 'prefetched SMEM operand 0']
  %s0 = inlined_call_operand.vmem [shape: f32[12], index: 0, kind: input, shape index: {}]
  %s1 = inlined_call_operand.vmem [shape: f32[3,384], index: 1, kind: input, shape index: {}]
  %s2 = inlined_call_operand.vmem [shape: f32[3,384], index: 2, kind: output, shape index: {}]
  %s3 = sld [smem:[#allocation0]]
  $region14: #{transform_points.1} parent=0
    _
  %s5 = ssub.s32 1, %s3
  %s6 = scalar_select 0, %s5, %s3
  %s7 = sshll.u32 %s0, 4
  %s8 = int_to_ptr.vmem [resolvable:$true] %s7
  %10 = dma.vmem_to_smem %s8, 16, [#allocation3], [#allocation2]
  %11 = dma.done [#allocation2], 16
  %12 = sfence
  // Predicated region
  $region2: #{transform_points.1} parent=0 // pred_check
    _
  $region3: #{transform_points.1} parent=0 // pred_check_branch
    %14 = sbr.rel (0) target = $region5
  $region4: #{transform_points.1} parent=0 // pred_region
    _
  $region5: #{transform_points.1} parent=0 // pred_fallthru
    _
  %s15 = sld [smem:[#allocation3]]
  %s16 = sld [smem:[#allocation3 + $0x1]]
  %s17 = sld [smem:[#allocation3 + $0x2]]
  %s18 = sld [smem:[#allocation3 + $0x3]]
  %s19 = sld [smem:[#allocation3 + $0x4]]
  %s20 = sld [smem:[#allocation3 + $0x5]]
  %s21 = sld [smem:[#allocation3 + $0x6]]
  %s22 = sld [smem:[#allocation3 + $0x7]]
  %s23 = sld [smem:[#allocation3 + $0x8]]
  %s24 = sld [smem:[#allocation3 + $0x9]]
  %s25 = sld [smem:[#allocation3 + $0xa]]
  %s26 = sld [smem:[#allocation3 + $0xb]]
  %v27 = vld [vmem:[%s1] ss:$4 sm:$0x7]
  %s28 = scalar_lea.vmem %s1, 1
  %v29 = vld [vmem:[%s28] ss:$4 sm:$0x7]
  %s30 = scalar_lea.vmem %s1, 2
  %v31 = vld [vmem:[%s30] ss:$4 sm:$0x7]
  %v32 = vstv %s15
  %v33 = vmul.f32 %v32, %v27
  %v34 = vstv %s16
  %v35 = vmul.f32 %v34, %v29
  %v36 = vadd.f32 %v33, %v35
  %v37 = vstv %s17
  %v38 = vmul.f32 %v37, %v31
  %v39 = vadd.f32 %v36, %v38
  %v40 = vstv %s24
  %v41 = vadd.f32 %v39, %v40
  %v42 = vlaneseq
  %vm43 = vcmp.ge.s32.totalorder %v42, 0
  %vm44 = vcmp.lt.s32.totalorder %v42, 384
  %vm45 = vmand %vm43, %vm44
  %46 = vst.msk [vmem:[%s2] ss:$4 sm:$0x7] %vm45, %v41
  %v47 = vstv %s18
  %v48 = vmul.f32 %v47, %v27
  %v49 = vstv %s19
  %v50 = vmul.f32 %v49, %v29
  %v51 = vadd.f32 %v48, %v50
  %v52 = vstv %s20
  %v53 = vmul.f32 %v52, %v31
  %v54 = vadd.f32 %v51, %v53
  %v55 = vstv %s25
  %v56 = vadd.f32 %v54, %v55
  %s57 = scalar_lea.vmem %s2, 1
  %58 = vst.msk [vmem:[%s57] ss:$4 sm:$0x7] %vm45, %v56
  %v59 = vstv %s21
  %v60 = vmul.f32 %v59, %v27
  %v61 = vstv %s22
  %v62 = vmul.f32 %v61, %v29
  %v63 = vadd.f32 %v60, %v62
  %v64 = vstv %s23
  %v65 = vmul.f32 %v64, %v31
  %v66 = vadd.f32 %v63, %v65
  %v67 = vstv %s26
  %v68 = vadd.f32 %v66, %v67
  %s69 = scalar_lea.vmem %s2, 2
  %70 = vst.msk [vmem:[%s69] ss:$4 sm:$0x7] %vm45, %v68
  // Predicated region
  $region6: #{transform_points.1} parent=0 // pred_check
    _
  $region7: #{transform_points.1} parent=0 // pred_check_branch
    %72 = sbr.rel (0) target = $region9
  $region8: #{transform_points.1} parent=0 // pred_region
    _
  $region9: #{transform_points.1} parent=0 // pred_fallthru
    _
  // Predicated region
  $region10: #{transform_points.1} parent=0 // pred_check
    _
  $region11: #{transform_points.1} parent=0 // pred_check_branch
    %74 = sbr.rel (0) target = $region13
  $region12: #{transform_points.1} parent=0 // pred_region
    _
  $region13: #{transform_points.1} parent=0 // pred_fallthru
    _

</llo_original>
